<compile_context>
chip_gen: v7x
topology: tpu7x:2x2x1
jax: 0.10.0
libtpu: 0.0.40
codegen_flags: <defaults>
</compile_context>

<pallas_src>
import math

import jax
import jax.numpy as jnp
from jax.experimental import pallas as pl
from jax.experimental.pallas import tpu as pltpu

SMALL_BYTES = 1 << 20           # below this: single-block kernel, no plumbing
BLOCK_BYTE_BUDGET = 4 << 20     # ~4 MiB per block; 2 in + 2 out bufs ~ 16 MiB
VMEM_LIMIT_BYTES = 32 << 20     # covers the working set on v5e/v6e/v7x
MAX_COLS = 4096                 # lane-dense last dim, multiple of 128
FALLBACK_COLS = 512             # used only when nothing divides exactly


def _identity_kernel(x_ref, o_ref):
    # Pure pass-through copy of the VMEM tile.
    o_ref[...] = x_ref[...]


def _pick_cols(total):
    """Largest multiple of 128 (<= MAX_COLS) that divides `total`, else None."""
    for c in range(MAX_COLS, 127, -128):
        if total % c == 0:
            return c
    return None


def _identity_impl(x: jax.Array) -> jax.Array:
    orig_shape = x.shape
    orig_dtype = x.dtype
    total = math.prod(orig_shape)

    if total == 0:
        # Nothing to copy.
        return x

    itemsize = jnp.dtype(orig_dtype).itemsize
    nbytes = total * itemsize

    # --- tiny inputs: one full-array block, no reshape/pad plumbing. -------
    if nbytes <= SMALL_BYTES:
        x2 = x if x.ndim >= 2 else x.reshape(1, -1)
        out = pl.pallas_call(
            _identity_kernel,
            out_shape=jax.ShapeDtypeStruct(x2.shape, orig_dtype),
        )(x2)
        return out.reshape(orig_shape)

    # --- large inputs: lane-dense tiled copy. -------------------------------
    # Sublane multiple: 8 for 32-bit, 16 for 16-bit, 32 for 8-bit dtypes
    # (sub-32-bit dtypes pack along sublanes).
    sublane_mult = 8 * max(1, 4 // itemsize)

    cols = _pick_cols(total)
    padded = cols is None
    if padded:
        # Rare fallback: element count has no usable factor of 128.
        cols = FALLBACK_COLS
        rows = pl.cdiv(total, cols)
        flat = jnp.pad(x.reshape(-1), (0, rows * cols - total))
        x2 = flat.reshape(rows, cols)
    else:
        rows = total // cols
        x2 = x.reshape(rows, cols)        # contiguous bitcast, no HBM pass

    # Byte-budgeted tile rows (sublane-aligned), capped so the grid has at
    # least two steps whenever possible (v7x megacore sharding).
    budget_rows = max(
        sublane_mult,
        (BLOCK_BYTE_BUDGET // (cols * itemsize)) // sublane_mult * sublane_mult,
    )
    half_rows = (rows // 2) // sublane_mult * sublane_mult
    if half_rows >= sublane_mult:
        tile_rows = min(budget_rows, half_rows)
    else:
        tile_rows = rows                  # block == full dim is always legal

    grid = (pl.cdiv(rows, tile_rows),)    # ragged last block handled by Pallas

    extra = {}
    if padded:
        # The padded slab is a fresh intermediate -> aliasing is copy-free
        # and lets XLA elide the separate output allocation.
        extra["input_output_aliases"] = {0: 0}

    out2 = pl.pallas_call(
        _identity_kernel,
        out_shape=jax.ShapeDtypeStruct((rows, cols), orig_dtype),
        grid_spec=pltpu.PrefetchScalarGridSpec(
            num_scalar_prefetch=0,
            grid=grid,
            in_specs=[pl.BlockSpec((tile_rows, cols), lambda i: (i, 0))],
            out_specs=pl.BlockSpec((tile_rows, cols), lambda i: (i, 0)),
        ),
        compiler_params=pltpu.CompilerParams(
            dimension_semantics=("parallel",),
            vmem_limit_bytes=VMEM_LIMIT_BYTES,
        ),
        **extra,
    )(x2)

    if padded:
        return out2.reshape(-1)[:total].reshape(orig_shape)
    return out2.reshape(orig_shape)


# jit so the reshape plumbing fuses around the pallas_call; the input is NOT
# donated (callers may keep using x), hence no aliasing on the common path.
identity = jax.jit(_identity_impl)


if __name__ == "__main__":
    key = jax.random.PRNGKey(0)

    # Small NCHW input consistent with an image-classification module.
    x = jax.random.normal(key, (2, 4, 16, 16), dtype=jnp.float32)
    y = identity(x)
    jax.block_until_ready(y)
    assert y.shape == x.shape and y.dtype == x.dtype
    assert bool(jnp.all(y == x))

    # Odd shape + 16-bit dtype (single full-array-block path).
    x2 = jax.random.normal(key, (3, 5, 7), dtype=jnp.bfloat16)
    y2 = identity(x2)
    jax.block_until_ready(y2)
    assert y2.shape == x2.shape and y2.dtype == x2.dtype
    assert bool(jnp.all(y2 == x2))

    # Medium input to exercise the tiled lane-dense path (grid >= 2 steps).
    x3 = jax.random.normal(key, (4, 16, 128, 128), dtype=jnp.float32)
    y3 = identity(x3)
    jax.block_until_ready(y3)
    assert y3.shape == x3.shape and y3.dtype == x3.dtype
    assert bool(jnp.all(y3 == x3))

    print("KERNEL_OK")
</pallas_src>

<mosaic_0001>
module attributes {stable_mosaic.version = 11 : i64} {
  func.func @_identity_kernel(%arg0: memref<2x4x16x16xf32, #tpu.memory_space<vmem>>, %arg1: memref<2x4x16x16xf32, #tpu.memory_space<vmem>>) attributes {dimension_semantics = [], scalar_prefetch = 0 : i64, scratch_operands = 0 : i64, tpu.core_type = #tpu.core_type<tc>} {
    %c0 = arith.constant 0 : index
    %c0_0 = arith.constant 0 : index
    %c0_1 = arith.constant 0 : index
    %c0_2 = arith.constant 0 : index
    %0 = vector.load %arg0[%c0, %c0_0, %c0_1, %c0_2] : memref<2x4x16x16xf32, #tpu.memory_space<vmem>>, vector<2x4x16x16xf32>
    %c0_3 = arith.constant 0 : index
    %c0_4 = arith.constant 0 : index
    %c0_5 = arith.constant 0 : index
    %c0_6 = arith.constant 0 : index
    %1 = vector.load %arg1[%c0_3, %c0_4, %c0_5, %c0_6] : memref<2x4x16x16xf32, #tpu.memory_space<vmem>>, vector<2x4x16x16xf32>
    tpu.vector_store %arg1[%c0_3, %c0_4, %c0_5, %c0_6], %0 {strides = array<i32>} : memref<2x4x16x16xf32, #tpu.memory_space<vmem>>, vector<2x4x16x16xf32>,
    return
  }
}

</mosaic_0001>

<llo_original>
// kernel: _identity_impl.1
$region0: #{_identity_impl.1}
  #allocation0 [shape = 'u32[]', space=smem, size = 0x4, offset = 0x4, fixed_abs, tag = 'smem constant byte address 0x4 - core index']
  #allocation1 [shape = 'u32[144,128]{1,0:T(1,128)}', space=vmem, size = 0x12000, scoped, tag = 'internal scratch']
  %s0 = inlined_call_operand.hbm [shape: f32[2,4,16,16], index: 0, kind: input, shape index: {}]
  %s1 = inlined_call_operand.hbm [shape: f32[2,4,16,16], index: 1, kind: output, shape index: {}]
  %s2 = sld [smem:[#allocation0]]
  $region18: #{_identity_impl.1} parent=0
    _
  %s4 = ssub.s32 1, %s2
  %s5 = scalar_select 0, %s4, %s2
  $region1: #{_identity_impl.1} parent=0
    #allocation2 [shape = 'u8[65536]{0}', space=vmem, size = 0x10000, scoped, tag = 'input window, operand 0, single buffered']
    #allocation3 [shape = 's32[1]{0}', space=sflag, size = 0x4, scoped, tag = 'scoped memory for _identity_impl.1']
    #allocation4 [shape = 's32[1]{0}', space=sflag, size = 0x4, scoped, tag = 'scoped memory for _identity_impl.1']
    #allocation5 [shape = 'u8[65536]{0}', space=vmem, size = 0x10000, scoped, tag = 'output window, operand 0, single buffered']
    %6 = vsyncpa [#allocation3], 0
    %7 = vsyncpa [#allocation4], 0
    // Predicated region
    $region2: #{_identity_impl.1} parent=1 // pred_check
      _
    $region3: #{_identity_impl.1} parent=1 // pred_check_branch
      %9 = sbr.rel (0) target = $region5
    $region4: #{_identity_impl.1} parent=1 // pred_region
      %s11 = ssub.s32 2048, 2048
      %12 = vsyncadd [#allocation3], %s11
      %s13 = sshll.u32 [#allocation2], 4
      %s14 = int_to_ptr.vmem [resolvable:$true] %s13
      %19 = dma.hbm_to_vmem [thread:$0]  %s0, 2048, %s14, [#allocation3], 128, 128, 8
    $region5: #{_identity_impl.1} parent=1 // pred_fallthru
      _
    // Predicated region
    $region6: #{_identity_impl.1} parent=1 // pred_check
      _
    $region7: #{_identity_impl.1} parent=1 // pred_check_branch
      %21 = sbr.rel (0) target = $region9
    $region8: #{_identity_impl.1} parent=1 // pred_region
      %22 = dma.done [#allocation3], 2048
    $region9: #{_identity_impl.1} parent=1 // pred_fallthru
      _
    %v23 = vld [vmem:[#allocation2] sm:$0xff]
    %v24 = vld [vmem:[#allocation2 + $0x8] sm:$0xff]
    %v25 = vld [vmem:[#allocation2 + $0x10] sm:$0xff]
    %v26 = vld [vmem:[#allocation2 + $0x18] sm:$0xff]
    %v27 = vld [vmem:[#allocation2 + $0x20] sm:$0xff]
    %v28 = vld [vmem:[#allocation2 + $0x28] sm:$0xff]
    %v29 = vld [vmem:[#allocation2 + $0x30] sm:$0xff]
    %v30 = vld [vmem:[#allocation2 + $0x38] sm:$0xff]
    %v31 = vld [vmem:[#allocation2 + $0x40] sm:$0xff]
    %v32 = vld [vmem:[#allocation2 + $0x48] sm:$0xff]
    %v33 = vld [vmem:[#allocation2 + $0x50] sm:$0xff]
    %v34 = vld [vmem:[#allocation2 + $0x58] sm:$0xff]
    %v35 = vld [vmem:[#allocation2 + $0x60] sm:$0xff]
    %v36 = vld [vmem:[#allocation2 + $0x68] sm:$0xff]
    %v37 = vld [vmem:[#allocation2 + $0x70] sm:$0xff]
    %v38 = vld [vmem:[#allocation2 + $0x78] sm:$0xff]
    %vm39 = vcmask 130048
    %40 = vst.msk [vmem:[#allocation5] sm:$0xff] %vm39, %v23
    %41 = vst.msk [vmem:[#allocation5 + $0x8] sm:$0xff] %vm39, %v24
    %42 = vst.msk [vmem:[#allocation5 + $0x10] sm:$0xff] %vm39, %v25
    %43 = vst.msk [vmem:[#allocation5 + $0x18] sm:$0xff] %vm39, %v26
    %44 = vst.msk [vmem:[#allocation5 + $0x20] sm:$0xff] %vm39, %v27
    %45 = vst.msk [vmem:[#allocation5 + $0x28] sm:$0xff] %vm39, %v28
    %46 = vst.msk [vmem:[#allocation5 + $0x30] sm:$0xff] %vm39, %v29
    %47 = vst.msk [vmem:[#allocation5 + $0x38] sm:$0xff] %vm39, %v30
    %48 = vst.msk [vmem:[#allocation5 + $0x40] sm:$0xff] %vm39, %v31
    %49 = vst.msk [vmem:[#allocation5 + $0x48] sm:$0xff] %vm39, %v32
    %50 = vst.msk [vmem:[#allocation5 + $0x50] sm:$0xff] %vm39, %v33
    %51 = vst.msk [vmem:[#allocation5 + $0x58] sm:$0xff] %vm39, %v34
    %52 = vst.msk [vmem:[#allocation5 + $0x60] sm:$0xff] %vm39, %v35
    %53 = vst.msk [vmem:[#allocation5 + $0x68] sm:$0xff] %vm39, %v36
    %54 = vst.msk [vmem:[#allocation5 + $0x70] sm:$0xff] %vm39, %v37
    %55 = vst.msk [vmem:[#allocation5 + $0x78] sm:$0xff] %vm39, %v38
    // Predicated region
    $region10: #{_identity_impl.1} parent=1 // pred_check
      _
    $region11: #{_identity_impl.1} parent=1 // pred_check_branch
      %57 = sbr.rel (0) target = $region13
    $region12: #{_identity_impl.1} parent=1 // pred_region
      %s59 = ssub.s32 2048, 2048
      %60 = vsyncadd [#allocation4], %s59
      %s61 = sshll.u32 [#allocation5], 4
      %s62 = int_to_ptr.vmem [resolvable:$true] %s61
      %67 = dma.vmem_to_hbm [thread:$0]  %s62, 2048, %s1, [#allocation4], 128, 128, 8
    $region13: #{_identity_impl.1} parent=1 // pred_fallthru
      _
    // Predicated region
    $region14: #{_identity_impl.1} parent=1 // pred_check
      _
    $region15: #{_identity_impl.1} parent=1 // pred_check_branch
      %69 = sbr.rel (0) target = $region17
    $region16: #{_identity_impl.1} parent=1 // pred_region
      %70 = dma.done [#allocation4], 2048
    $region17: #{_identity_impl.1} parent=1 // pred_fallthru
      _
    %71 = vsyncpa [#allocation3], 1
    %72 = vsyncpa [#allocation4], 1

</llo_original>
